<compile_context>
chip_gen: v5e
topology: v5e:2x2
jax: 0.10.0
libtpu: 0.0.40
codegen_flags: <defaults>
</compile_context>

<pallas_src>
import functools
import math

import jax
import jax.numpy as jnp
from jax import lax
from jax.experimental import pallas as pl
from jax.experimental.pallas import tpu as pltpu

_LANE = 128
_SUBLANE = 8
_TWO_PI = 2.0 * math.pi


def _round_up(x: int, m: int) -> int:
    return ((x + m - 1) // m) * m


def _sinewave_kernel(freq_ref, out_ref, carry_ref, *, inv_sr: float, n_chunks: int):
    t = pl.program_id(1)

    @pl.when(t == 0)
    def _init():
        carry_ref[...] = jnp.zeros_like(carry_ref)

    # 128x128 inclusive-prefix matrix: U[k, j] = 1.0 if k <= j else 0.0
    row = lax.broadcasted_iota(jnp.int32, (_LANE, _LANE), 0)
    col = lax.broadcasted_iota(jnp.int32, (_LANE, _LANE), 1)
    u = (row <= col).astype(jnp.float32)

    carry = carry_ref[...]                      # (TR, 1) running phase, kept in [0, 1)
    for c in range(n_chunks):                   # static unroll over 128-lane chunks
        sl = slice(c * _LANE, (c + 1) * _LANE)
        x = freq_ref[:, sl].astype(jnp.float32) * jnp.float32(inv_sr)   # increments
        incl = jnp.dot(x, u, preferred_element_type=jnp.float32)        # inclusive scan (MXU)
        phase = (incl - x) + carry                                      # exclusive scan + carry
        phasor = phase - jnp.floor(phase)                               # wrap to [0, 1)
        out_ref[:, sl] = jnp.sin(jnp.float32(_TWO_PI) * phasor).astype(out_ref.dtype)
        carry = carry + jnp.sum(x, axis=-1, keepdims=True)              # add chunk total
        carry = carry - jnp.floor(carry)                                # keep it wrapped (mod 1)
    carry_ref[...] = carry


def sinewave(freq: jax.Array, sr: int, *, block_rows: int = 128, block_t: int = 512) -> jax.Array:
    """freq: (..., T) float array. Returns sin(2*pi*phasor(freq)) of same shape/dtype."""
    orig_shape = freq.shape
    T = orig_shape[-1]
    rows = 1
    for d in orig_shape[:-1]:
        rows *= d
    freq2d = freq.reshape(rows, T)

    # Lane-dense T tiling (multiples of 128).
    t128 = _round_up(max(T, 1), _LANE)
    if t128 <= block_t:
        tt = t128
        t_pad = tt
    else:
        tt = _round_up(block_t, _LANE)
        t_pad = _round_up(T, tt)

    # Sublane-aligned row tiling.
    tr = min(_round_up(block_rows, _SUBLANE), _round_up(rows, _SUBLANE))
    r_pad = _round_up(rows, tr)

    if (r_pad, t_pad) != (rows, T):
        freq2d = jnp.pad(freq2d, ((0, r_pad - rows), (0, t_pad - T)))

    grid = (r_pad // tr, t_pad // tt)

    out2d = pl.pallas_call(
        functools.partial(_sinewave_kernel, inv_sr=1.0 / float(sr), n_chunks=tt // _LANE),
        out_shape=jax.ShapeDtypeStruct((r_pad, t_pad), freq.dtype),
        grid_spec=pltpu.PrefetchScalarGridSpec(
            num_scalar_prefetch=0,
            grid=grid,
            in_specs=[pl.BlockSpec((tr, tt), lambda i, t: (i, t))],
            out_specs=pl.BlockSpec((tr, tt), lambda i, t: (i, t)),
            scratch_shapes=[pltpu.VMEM((tr, 1), jnp.float32)],
        ),
        compiler_params=pltpu.CompilerParams(
            dimension_semantics=("parallel", "arbitrary"),
        ),
    )(freq2d)

    if (r_pad, t_pad) != (rows, T):
        out2d = out2d[:rows, :T]
    return out2d.reshape(orig_shape)


def _sinewave_ref(freq: jax.Array, sr: int) -> jax.Array:
    """Pure-JAX reference mirroring the PyTorch code line-by-line."""
    increment = freq[..., :-1] / sr
    phase = jnp.cumsum(increment, axis=-1)
    phase = jnp.concatenate([jnp.zeros_like(freq[..., :1]), phase], axis=-1)
    phasor = phase - jnp.floor(phase)            # wrap to [0, 1)
    return jnp.sin(2.0 * jnp.pi * phasor)


if __name__ == "__main__":
    key = jax.random.PRNGKey(0)
    B, C, T = 2, 3, 640          # rows=6 (exercises row padding), T=640 (exercises T blocks + padding)
    sr = 16000
    freq = jax.random.uniform(key, (B, C, T), jnp.float32, minval=20.0, maxval=500.0)

    # Default tiling: (TR=8 rows-block, TT=512 time-block, 2 time blocks with carry).
    out = jax.block_until_ready(sinewave(freq, sr))
    ref = _sinewave_ref(freq, sr)
    assert out.shape == freq.shape
    assert out.dtype == freq.dtype
    assert float(jnp.max(jnp.abs(out - ref))) < 2e-3

    # Force tiny tiles to also exercise the multi-T-block mod-1 carry path.
    out_small = jax.block_until_ready(sinewave(freq, sr, block_rows=8, block_t=128))
    assert float(jnp.max(jnp.abs(out_small - ref))) < 2e-3

    print("KERNEL_OK")
</pallas_src>

<mosaic_0001>
module attributes {stable_mosaic.version = 11 : i64} {
  func.func @_sinewave_kernel(%arg0: i32, %arg1: i32, %arg2: memref<8x512xf32, #tpu.memory_space<vmem>>, %arg3: memref<8x512xf32, #tpu.memory_space<vmem>>, %arg4: memref<8x1xf32, #tpu.memory_space<vmem>>) attributes {dimension_semantics = [#tpu.dimension_semantics<parallel>, #tpu.dimension_semantics<arbitrary>], iteration_bounds = array<i64: 1, 2>, scalar_prefetch = 0 : i64, scratch_operands = 1 : i64, tpu.core_type = #tpu.core_type<tc>, window_params = [{transform_indices = @transform_0, window_bounds = array<i64: 8, 512>}, {transform_indices = @transform_1, window_bounds = array<i64: 8, 512>}]} {
    %c0_i32 = arith.constant 0 : i32
    %0 = arith.cmpi eq, %arg1, %c0_i32 : i32
    %1 = arith.extui %0 : i1 to i32
    %c0_i32_0 = arith.constant 0 : i32
    %2 = arith.cmpi ne, %1, %c0_i32_0 : i32
    scf.if %2 {
      %cst_32 = arith.constant 0.000000e+00 : f32
      %82 = vector.broadcast %cst_32 : f32 to vector<8x1xf32>
      %c0_33 = arith.constant 0 : index
      %c0_34 = arith.constant 0 : index
      %83 = vector.load %arg4[%c0_33, %c0_34] : memref<8x1xf32, #tpu.memory_space<vmem>>, vector<8x1xf32>
      tpu.vector_store %arg4[%c0_33, %c0_34], %82 {strides = array<i32>} : memref<8x1xf32, #tpu.memory_space<vmem>>, vector<8x1xf32>,
    } else {
    }
    %3 = tpu.iota {dimensions = array<i32: 0>} : vector<128x128xi32>
    %4 = tpu.iota {dimensions = array<i32: 1>} : vector<128x128xi32>
    %5 = arith.cmpi sle, %3, %4 : vector<128x128xi32>
    %6 = arith.extui %5 : vector<128x128xi1> to vector<128x128xi32>
    %7 = arith.sitofp %6 : vector<128x128xi32> to vector<128x128xf32>
    %c0 = arith.constant 0 : index
    %c0_1 = arith.constant 0 : index
    %8 = vector.load %arg4[%c0, %c0_1] : memref<8x1xf32, #tpu.memory_space<vmem>>, vector<8x1xf32>
    %c0_2 = arith.constant 0 : index
    %c0_3 = arith.constant 0 : index
    %9 = vector.load %arg2[%c0_2, %c0_3] : memref<8x512xf32, #tpu.memory_space<vmem>>, vector<8x128xf32>
    %cst = arith.constant 6.250000e-05 : f32
    %10 = vector.broadcast %cst : f32 to vector<8x128xf32>
    %11 = arith.mulf %9, %10 : vector<8x128xf32>
    %cst_4 = arith.constant dense<0.000000e+00> : vector<8x128xf32>
    %12 = tpu.matmul %11, %7, %cst_4 {dimension_numbers = #tpu.dot_dimension_numbers<[1], [0], [0], [1], [0, 0, 1, 1], [], []>} : vector<8x128xf32>, vector<128x128xf32>, vector<8x128xf32> -> vector<8x128xf32>
    %13 = arith.subf %12, %11 : vector<8x128xf32>
    %14 = vector.broadcast %8 : vector<8x1xf32> to vector<8x128xf32>
    %15 = arith.addf %13, %14 : vector<8x128xf32>
    %16 = math.floor %15 : vector<8x128xf32>
    %17 = arith.subf %15, %16 : vector<8x128xf32>
    %cst_5 = arith.constant 6.28318548 : f32
    %18 = vector.broadcast %cst_5 : f32 to vector<8x128xf32>
    %19 = arith.mulf %18, %17 : vector<8x128xf32>
    %20 = math.sin %19 : vector<8x128xf32>
    %c0_6 = arith.constant 0 : index
    %c0_7 = arith.constant 0 : index
    %21 = vector.load %arg3[%c0_6, %c0_7] : memref<8x512xf32, #tpu.memory_space<vmem>>, vector<8x128xf32>
    tpu.vector_store %arg3[%c0_6, %c0_7], %20 {strides = array<i32>} : memref<8x512xf32, #tpu.memory_space<vmem>>, vector<8x128xf32>,
    %cst_8 = arith.constant dense<0.000000e+00> : vector<8xf32>
    %22 = vector.multi_reduction <add>, %11, %cst_8 [1] : vector<8x128xf32> to vector<8xf32>
    %23 = vector.shape_cast %22 : vector<8xf32> to vector<8x1xf32>
    %24 = arith.addf %8, %23 : vector<8x1xf32>
    %25 = math.floor %24 : vector<8x1xf32>
    %26 = arith.subf %24, %25 : vector<8x1xf32>
    %c0_9 = arith.constant 0 : index
    %c128 = arith.constant 128 : index
    %27 = vector.load %arg2[%c0_9, %c128] : memref<8x512xf32, #tpu.memory_space<vmem>>, vector<8x128xf32>
    %cst_10 = arith.constant 6.250000e-05 : f32
    %28 = vector.broadcast %cst_10 : f32 to vector<8x128xf32>
    %29 = arith.mulf %27, %28 : vector<8x128xf32>
    %cst_11 = arith.constant dense<0.000000e+00> : vector<8x128xf32>
    %30 = tpu.matmul %29, %7, %cst_11 {dimension_numbers = #tpu.dot_dimension_numbers<[1], [0], [0], [1], [0, 0, 1, 1], [], []>} : vector<8x128xf32>, vector<128x128xf32>, vector<8x128xf32> -> vector<8x128xf32>
    %31 = arith.subf %30, %29 : vector<8x128xf32>
    %32 = vector.broadcast %26 : vector<8x1xf32> to vector<8x128xf32>
    %33 = arith.addf %31, %32 : vector<8x128xf32>
    %34 = math.floor %33 : vector<8x128xf32>
    %35 = arith.subf %33, %34 : vector<8x128xf32>
    %cst_12 = arith.constant 6.28318548 : f32
    %36 = vector.broadcast %cst_12 : f32 to vector<8x128xf32>
    %37 = arith.mulf %36, %35 : vector<8x128xf32>
    %38 = math.sin %37 : vector<8x128xf32>
    %c0_13 = arith.constant 0 : index
    %c128_14 = arith.constant 128 : index
    %39 = vector.load %arg3[%c0_13, %c128_14] : memref<8x512xf32, #tpu.memory_space<vmem>>, vector<8x128xf32>
    tpu.vector_store %arg3[%c0_13, %c128_14], %38 {strides = array<i32>} : memref<8x512xf32, #tpu.memory_space<vmem>>, vector<8x128xf32>,
    %cst_15 = arith.constant dense<0.000000e+00> : vector<8xf32>
    %40 = vector.multi_reduction <add>, %29, %cst_15 [1] : vector<8x128xf32> to vector<8xf32>
    %41 = vector.shape_cast %40 : vector<8xf32> to vector<8x1xf32>
    %42 = arith.addf %26, %41 : vector<8x1xf32>
    %43 = math.floor %42 : vector<8x1xf32>
    %44 = arith.subf %42, %43 : vector<8x1xf32>
    %c0_16 = arith.constant 0 : index
    %c256 = arith.constant 256 : index
    %45 = vector.load %arg2[%c0_16, %c256] : memref<8x512xf32, #tpu.memory_space<vmem>>, vector<8x128xf32>
    %cst_17 = arith.constant 6.250000e-05 : f32
    %46 = vector.broadcast %cst_17 : f32 to vector<8x128xf32>
    %47 = arith.mulf %45, %46 : vector<8x128xf32>
    %cst_18 = arith.constant dense<0.000000e+00> : vector<8x128xf32>
    %48 = tpu.matmul %47, %7, %cst_18 {dimension_numbers = #tpu.dot_dimension_numbers<[1], [0], [0], [1], [0, 0, 1, 1], [], []>} : vector<8x128xf32>, vector<128x128xf32>, vector<8x128xf32> -> vector<8x128xf32>
    %49 = arith.subf %48, %47 : vector<8x128xf32>
    %50 = vector.broadcast %44 : vector<8x1xf32> to vector<8x128xf32>
    %51 = arith.addf %49, %50 : vector<8x128xf32>
    %52 = math.floor %51 : vector<8x128xf32>
    %53 = arith.subf %51, %52 : vector<8x128xf32>
    %cst_19 = arith.constant 6.28318548 : f32
    %54 = vector.broadcast %cst_19 : f32 to vector<8x128xf32>
    %55 = arith.mulf %54, %53 : vector<8x128xf32>
    %56 = math.sin %55 : vector<8x128xf32>
    %c0_20 = arith.constant 0 : index
    %c256_21 = arith.constant 256 : index
    %57 = vector.load %arg3[%c0_20, %c256_21] : memref<8x512xf32, #tpu.memory_space<vmem>>, vector<8x128xf32>
    tpu.vector_store %arg3[%c0_20, %c256_21], %56 {strides = array<i32>} : memref<8x512xf32, #tpu.memory_space<vmem>>, vector<8x128xf32>,
    %cst_22 = arith.constant dense<0.000000e+00> : vector<8xf32>
    %58 = vector.multi_reduction <add>, %47, %cst_22 [1] : vector<8x128xf32> to vector<8xf32>
    %59 = vector.shape_cast %58 : vector<8xf32> to vector<8x1xf32>
    %60 = arith.addf %44, %59 : vector<8x1xf32>
    %61 = math.floor %60 : vector<8x1xf32>
    %62 = arith.subf %60, %61 : vector<8x1xf32>
    %c0_23 = arith.constant 0 : index
    %c384 = arith.constant 384 : index
    %63 = vector.load %arg2[%c0_23, %c384] : memref<8x512xf32, #tpu.memory_space<vmem>>, vector<8x128xf32>
    %cst_24 = arith.constant 6.250000e-05 : f32
    %64 = vector.broadcast %cst_24 : f32 to vector<8x128xf32>
    %65 = arith.mulf %63, %64 : vector<8x128xf32>
    %cst_25 = arith.constant dense<0.000000e+00> : vector<8x128xf32>
    %66 = tpu.matmul %65, %7, %cst_25 {dimension_numbers = #tpu.dot_dimension_numbers<[1], [0], [0], [1], [0, 0, 1, 1], [], []>} : vector<8x128xf32>, vector<128x128xf32>, vector<8x128xf32> -> vector<8x128xf32>
    %67 = arith.subf %66, %65 : vector<8x128xf32>
    %68 = vector.broadcast %62 : vector<8x1xf32> to vector<8x128xf32>
    %69 = arith.addf %67, %68 : vector<8x128xf32>
    %70 = math.floor %69 : vector<8x128xf32>
    %71 = arith.subf %69, %70 : vector<8x128xf32>
    %cst_26 = arith.constant 6.28318548 : f32
    %72 = vector.broadcast %cst_26 : f32 to vector<8x128xf32>
    %73 = arith.mulf %72, %71 : vector<8x128xf32>
    %74 = math.sin %73 : vector<8x128xf32>
    %c0_27 = arith.constant 0 : index
    %c384_28 = arith.constant 384 : index
    %75 = vector.load %arg3[%c0_27, %c384_28] : memref<8x512xf32, #tpu.memory_space<vmem>>, vector<8x128xf32>
    tpu.vector_store %arg3[%c0_27, %c384_28], %74 {strides = array<i32>} : memref<8x512xf32, #tpu.memory_space<vmem>>, vector<8x128xf32>,
    %cst_29 = arith.constant dense<0.000000e+00> : vector<8xf32>
    %76 = vector.multi_reduction <add>, %65, %cst_29 [1] : vector<8x128xf32> to vector<8xf32>
    %77 = vector.shape_cast %76 : vector<8xf32> to vector<8x1xf32>
    %78 = arith.addf %62, %77 : vector<8x1xf32>
    %79 = math.floor %78 : vector<8x1xf32>
    %80 = arith.subf %78, %79 : vector<8x1xf32>
    %c0_30 = arith.constant 0 : index
    %c0_31 = arith.constant 0 : index
    %81 = vector.load %arg4[%c0_30, %c0_31] : memref<8x1xf32, #tpu.memory_space<vmem>>, vector<8x1xf32>
    tpu.vector_store %arg4[%c0_30, %c0_31], %80 {strides = array<i32>} : memref<8x1xf32, #tpu.memory_space<vmem>>, vector<8x1xf32>,
    return
  }
  func.func @transform_0(%arg0: i32, %arg1: i32) -> (i32, i32) {
    %c0_i32 = arith.constant 0 : i32
    return %arg0, %arg1 : i32, i32
  }
  func.func @transform_1(%arg0: i32, %arg1: i32) -> (i32, i32) {
    %c0_i32 = arith.constant 0 : i32
    return %arg0, %arg1 : i32, i32
  }
}

</mosaic_0001>

<llo_original>
// kernel: tpu_custom_call.1
$region0: #{tpu_custom_call.1}
  #allocation0 [shape = 'u32[]', space=smem, size = 0x4, offset = 0x4, fixed_abs, tag = 'smem constant byte address 0x4 - core index']
  #allocation1 [shape = 'u32[72,128]{1,0:T(1,128)}', space=vmem, size = 0x9000, scoped, tag = 'internal scratch']
  #allocation2 [shape = 'f32[8,1]{1,0:T(8,128)}', space=vmem, size = 0x1000, scoped, tag = 'scratch operand']
  %s0 = inlined_call_operand.hbm [shape: f32[8,1024], index: 0, kind: input, shape index: {}]
  %s1 = inlined_call_operand.hbm [shape: f32[8,1024], index: 1, kind: output, shape index: {}]
  %s2 = sld [smem:[#allocation0]]
  $region45: #{tpu_custom_call.1} parent=0
    _
  %s4 = ssub.s32 1, %s2
  %s5 = scalar_select 0, %s4, %s2
  $region1: #{tpu_custom_call.1} parent=0
    #allocation3 [shape = 'u8[32768]{0}', space=vmem, size = 0x8000, scoped, tag = 'input window, operand 0']
    #allocation4 [shape = 's32[2]{0}', space=sflag, size = 0x8, scoped, tag = 'scoped memory for tpu_custom_call.1']
    #allocation5 [shape = 's32[2]{0}', space=sflag, size = 0x8, scoped, tag = 'scoped memory for tpu_custom_call.1']
    #allocation6 [shape = 'u8[32768]{0}', space=vmem, size = 0x8000, scoped, tag = 'output window, operand 0']
    %6 = vsyncpa [#allocation4], 0
    %s7 = scalar_lea.sflag [#allocation4], 1
    %8 = vsyncpa %s7, 0
    %9 = vsyncpa [#allocation5], 0
    %s10 = scalar_lea.sflag [#allocation5], 1
    %11 = vsyncpa %s10, 0
    loop: start=0, step=1, limit=4
    $region2: #{tpu_custom_call.1} parent=1 // loop_pre_header
      _
    $region3: #{tpu_custom_call.1} parent=1 // loop_header
      %s13 = sphi 0, %s17
      %p14 = scmp.ge.s32.totalorder %s13, 4
      %s20 = sphi 0, %s32
      %s21 = sphi 0, %s28
      %s22 = sphi 0, %s20
      %s23 = sphi 0, %s21
      %s24 = sphi 0, %s22
      %s25 = sphi 0, %s23
      %s37 = sphi 0, %s39
      %s40 = sphi 0, %s37
      %s41 = sphi 0, %s40
      %s57 = sphi 0, %s41
      %s65 = sphi 0, %s67
      %s68 = sphi 0, %s65
      %s69 = sphi 0, %s68
      %s85 = sphi 0, %s69
    $region4: #{tpu_custom_call.1} parent=1 // loop_header_branch
      %16 = sbr.rel (%p14) target = $region8
    $region5: #{tpu_custom_call.1} parent=1 // loop_body
      %s18 = ssub.s32 %s13, 1
      %s19 = ssub.s32 %s13, 2
      %s26 = sadd.s32 1, %s21
      %p27 = scmp.ge.s32.totalorder %s26, 2
      %s28 = scalar_select %p27, 0, %s26
      %s29 = sadd.s32 1, %s20
      %s30 = scalar_select %p27, %s29, %s20
      %p31 = scmp.ge.s32.totalorder %s30, 1
      %s32 = scalar_select %p31, 0, %s30
      %s33 = ssub.s32 %s20, %s32
      %s34 = ssub.s32 %s21, %s28
      %s35 = sor.u32 %s33, %s34
      %p36 = scmp.eq.s32.totalorder %s35, 0
      %s38 = sadd.s32 %s37, 1
      %s39 = scalar_select %p36, %s37, %s38
      %p42 = pneg %p36
      %p43 = scmp.eq.s32.totalorder %s13, 1
      %p44 = por %p42, %p43
      %p45 = scmp.ne.s32.totalorder %s37, %s40
      %p46 = scmp.eq.s32.totalorder %s13, 0
      %p47 = por %p45, %p46
      %p48 = scmp.ne.s32.totalorder %s37, %s40
      %p49 = scmp.eq.s32.totalorder %s18, 1
      %p50 = por %p48, %p49
      %p51 = scmp.ne.s32.totalorder %s40, %s41
      %p52 = scmp.eq.s32.totalorder %s18, 0
      %p53 = por %p51, %p52
      %p54 = scmp.ne.s32.totalorder %s40, %s41
      %p55 = scmp.eq.s32.totalorder %s19, 1
      %p56 = por %p54, %p55
      %p58 = scmp.ne.s32.totalorder %s41, %s57
      %p59 = scmp.eq.s32.totalorder %s19, 0
      %p60 = por %p58, %p59
      %s61 = ssub.s32 %s20, %s32
      %s62 = ssub.s32 %s21, %s28
      %s63 = sor.u32 %s61, %s62
      %p64 = scmp.eq.s32.totalorder %s63, 0
      %s66 = sadd.s32 %s65, 1
      %s67 = scalar_select %p64, %s65, %s66
      %p70 = pneg %p64
      %p71 = scmp.eq.s32.totalorder %s13, 1
      %p72 = por %p70, %p71
      %p73 = scmp.ne.s32.totalorder %s65, %s68
      %p74 = scmp.eq.s32.totalorder %s13, 0
      %p75 = por %p73, %p74
      %p76 = scmp.ne.s32.totalorder %s65, %s68
      %p77 = scmp.eq.s32.totalorder %s18, 1
      %p78 = por %p76, %p77
      %p79 = scmp.ne.s32.totalorder %s68, %s69
      %p80 = scmp.eq.s32.totalorder %s18, 0
      %p81 = por %p79, %p80
      %p82 = scmp.ne.s32.totalorder %s68, %s69
      %p83 = scmp.eq.s32.totalorder %s19, 1
      %p84 = por %p82, %p83
      %p86 = scmp.ne.s32.totalorder %s69, %s85
      %p87 = scmp.eq.s32.totalorder %s19, 0
      %p88 = por %p86, %p87
      %p89 = scmp.le.s32.totalorder 1, %s13
      %p90 = scmp.lt.s32.totalorder %s13, 3
      %p91 = pnand %p89, %p90
      %p92 = pneg %p91
      // Predicated region
      $region9: #{tpu_custom_call.1} parent=5 // pred_check
        _
      $region10: #{tpu_custom_call.1} parent=5 // pred_check_branch
        %94 = sbr.rel (%p91) target = $region12
      $region11: #{tpu_custom_call.1} parent=5 // pred_region
        %s95 = ssub.s32 %s13, 1
      $region12: #{tpu_custom_call.1} parent=5 // pred_fallthru
        _
      %p96 = scmp.lt.s32.totalorder %s13, 2
      // Predicated region
      $region13: #{tpu_custom_call.1} parent=5 // pred_check
        %p97 = pneg %p96
      $region14: #{tpu_custom_call.1} parent=5 // pred_check_branch
        %99 = sbr.rel (%p97) target = $region16
      $region15: #{tpu_custom_call.1} parent=5 // pred_region
        // Predicated region
        $region17: #{tpu_custom_call.1} parent=15 // pred_check
          %p100 = pneg %p47
        $region18: #{tpu_custom_call.1} parent=15 // pred_check_branch
          %102 = sbr.rel (%p100) target = $region20
        $region19: #{tpu_custom_call.1} parent=15 // pred_region
          %s103 = sand.u32 %s37, 1
          %s104 = scalar_lea.sflag [#allocation4], %s103
          %s105 = sand.u32 %s37, 1
          %s106 = smul.addr %s105, 32
          %s107 = scalar_lea.vmem [#allocation3], %s106
          %s108 = smul.u32 4, %s21
          %110 = vsyncadd %s104, 0
          %s111 = smul.addr %s20, 8
          %s112 = sadd.s32 %s108, %s111
          %s113 = smul.addr %s112, 8
          %s114 = scalar_lea.hbm %s0, %s113
          %s116 = sshll.u32 %s114, 4
          %s117 = int_to_ptr.hbm [resolvable:$true] %s116
          %s118 = sshll.u32 %s107, 4
          %s119 = int_to_ptr.vmem [resolvable:$true] %s118
          %121 = dma.hbm_to_vmem [thread:$0]  %s117, 512, %s119, %s104
        $region20: #{tpu_custom_call.1} parent=15 // pred_fallthru
          _
      $region16: #{tpu_custom_call.1} parent=5 // pred_fallthru
        _
      %p122 = scmp.le.s32.totalorder 1, %s13
      %p123 = scmp.lt.s32.totalorder %s13, 3
      %p124 = pnand %p122, %p123
      %p125 = pneg %p124
      // Predicated region
      $region21: #{tpu_custom_call.1} parent=5 // pred_check
        _
      $region22: #{tpu_custom_call.1} parent=5 // pred_check_branch
        %127 = sbr.rel (%p124) target = $region24
      $region23: #{tpu_custom_call.1} parent=5 // pred_region
        %s128 = ssub.s32 %s13, 1
        %s129 = sand.u32 %s40, 1
        %s130 = scalar_lea.sflag [#allocation4], %s129
        %s131 = sand.u32 %s40, 1
        %s132 = smul.addr %s131, 32
        %s133 = scalar_lea.vmem [#allocation3], %s132
        // Predicated region
        $region25: #{tpu_custom_call.1} parent=23 // pred_check
          %p134 = pneg %p53
        $region26: #{tpu_custom_call.1} parent=23 // pred_check_branch
          %136 = sbr.rel (%p134) target = $region28
        $region27: #{tpu_custom_call.1} parent=23 // pred_region
          %138 = dma.done %s130, 512
        $region28: #{tpu_custom_call.1} parent=23 // pred_fallthru
          _
        %s139 = sand.u32 %s40, 1
        %s140 = scalar_lea.sflag [#allocation4], %s139
        %s141 = sand.u32 %s40, 1
        %s142 = smul.addr %s141, 32
        %s143 = scalar_lea.vmem [#allocation3], %s142
        %p144 = pneg %p53
        %p145 = pneg %p50
        %p146 = pneg %p81
        %p147 = pneg %p78
        %s148 = sand.u32 %s68, 1
        %s149 = scalar_lea.sflag [#allocation5], %s148
        %s150 = sand.u32 %s68, 1
        %s151 = smul.addr %s150, 32
        %s152 = scalar_lea.vmem [#allocation6], %s151
        %s153 = smul.u32 4, %s23
        %s154 = smul.u32 4, %s23
        %p155 = scmp.eq.s32.totalorder %s23, 0
        // Predicated region
        $region29: #{tpu_custom_call.1} parent=23 // pred_check
          %p156 = pneg %p155
        $region30: #{tpu_custom_call.1} parent=23 // pred_check_branch
          %158 = sbr.rel (%p156) target = $region32
        $region31: #{tpu_custom_call.1} parent=23 // pred_region
          %vm159 = vcmask 7168
          %160 = vst.msk [vmem:[#allocation2] sm:$0xff] %vm159, 0.0
        $region32: #{tpu_custom_call.1} parent=23 // pred_fallthru
          _
        %v161 = vlaneseq
        %v162 = vshrl.u32 %v161, 7
        %v163 = vadd.s32 %v162, 8
        %v164 = vadd.s32 %v162, 16
        %v165 = vadd.s32 %v162, 24
        %v166 = vadd.s32 %v162, 32
        %v167 = vadd.s32 %v162, 40
        %v168 = vadd.s32 %v162, 48
        %v169 = vadd.s32 %v162, 56
        %v170 = vadd.s32 %v162, 64
        %v171 = vadd.s32 %v162, 72
        %v172 = vadd.s32 %v162, 80
        %v173 = vadd.s32 %v162, 88
        %v174 = vadd.s32 %v162, 96
        %v175 = vadd.s32 %v162, 104
        %v176 = vadd.s32 %v162, 112
        %v177 = vadd.s32 %v162, 120
        %v178 = vlaneseq
        %v179 = vand.u32 %v178, 127
        %vm180 = vcmp.le.s32.totalorder %v162, %v179
        %vm181 = vcmp.le.s32.totalorder %v163, %v179
        %vm182 = vcmp.le.s32.totalorder %v164, %v179
        %vm183 = vcmp.le.s32.totalorder %v165, %v179
        %vm184 = vcmp.le.s32.totalorder %v166, %v179
        %vm185 = vcmp.le.s32.totalorder %v167, %v179
        %vm186 = vcmp.le.s32.totalorder %v168, %v179
        %vm187 = vcmp.le.s32.totalorder %v169, %v179
        %vm188 = vcmp.le.s32.totalorder %v170, %v179
        %vm189 = vcmp.le.s32.totalorder %v171, %v179
        %vm190 = vcmp.le.s32.totalorder %v172, %v179
        %vm191 = vcmp.le.s32.totalorder %v173, %v179
        %vm192 = vcmp.le.s32.totalorder %v174, %v179
        %vm193 = vcmp.le.s32.totalorder %v175, %v179
        %vm194 = vcmp.le.s32.totalorder %v176, %v179
        %vm195 = vcmp.le.s32.totalorder %v177, %v179
        %v196 = vsel %vm180, 1, 0
        %v197 = vsel %vm181, 1, 0
        %v198 = vsel %vm182, 1, 0
        %v199 = vsel %vm183, 1, 0
        %v200 = vsel %vm184, 1, 0
        %v201 = vsel %vm185, 1, 0
        %v202 = vsel %vm186, 1, 0
        %v203 = vsel %vm187, 1, 0
        %v204 = vsel %vm188, 1, 0
        %v205 = vsel %vm189, 1, 0
        %v206 = vsel %vm190, 1, 0
        %v207 = vsel %vm191, 1, 0
        %v208 = vsel %vm192, 1, 0
        %v209 = vsel %vm193, 1, 0
        %v210 = vsel %vm194, 1, 0
        %v211 = vsel %vm195, 1, 0
        %v212 = vcvt.s32.f32 %v196
        %v213 = vcvt.s32.f32 %v197
        %v214 = vcvt.s32.f32 %v198
        %v215 = vcvt.s32.f32 %v199
        %v216 = vcvt.s32.f32 %v200
        %v217 = vcvt.s32.f32 %v201
        %v218 = vcvt.s32.f32 %v202
        %v219 = vcvt.s32.f32 %v203
        %v220 = vcvt.s32.f32 %v204
        %v221 = vcvt.s32.f32 %v205
        %v222 = vcvt.s32.f32 %v206
        %v223 = vcvt.s32.f32 %v207
        %v224 = vcvt.s32.f32 %v208
        %v225 = vcvt.s32.f32 %v209
        %v226 = vcvt.s32.f32 %v210
        %v227 = vcvt.s32.f32 %v211
        %v228 = vld [vmem:[#allocation2] sm:$0xff]
        %v229 = vld [vmem:[%s133] sm:$0xff]
        %v230 = vmul.f32 %v229, 6.25e-05
        %231 = vmatpush.msra.mxu0 %v227
        %232 = vmatpush.msra.mxu0 %v226
        %233 = vmatpush.msra.mxu0 %v225
        %234 = vmatpush.msra.mxu0 %v224
        %235 = vmatpush.msra.mxu0 %v223
        %236 = vmatpush.msra.mxu0 %v222
        %237 = vmatpush.msra.mxu0 %v221
        %238 = vmatpush.msra.mxu0 %v220
        %239 = vmatpush.msra.mxu0 %v219
        %240 = vmatpush.msra.mxu0 %v218
        %241 = vmatpush.msra.mxu0 %v217
        %242 = vmatpush.msra.mxu0 %v216
        %243 = vmatpush.msra.mxu0 %v215
        %244 = vmatpush.msra.mxu0 %v214
        %245 = vmatpush.msra.mxu0 %v213
        %246 = vmatpush.msra.mxu0 %v212
        %247 = vmatmul.f32.gmra.mxu0 %v230
        %v248 = vpop.f32.mrf.mxu0
        %v249 = vadd.f32 0.0, %v248
        %250 = vdwg.mxu0
        %v251 = vsub.f32 %v249, %v230
        %253 = vset.pattern.permute.xlu0 0
        %254 = vperm.xlu0 %253, %v228
        %v255 = vpop.permute.xlu0 %254
        %v257 = vadd.f32 %v251, %v255
        %v258 = vfloor.f32 %v257
        %v259 = vsub.f32 %v257, %v258
        %v260 = vmul.f32 %v259, 6.2831855
        %v261 = vand.u32 2147483647, %v260
        %vm262 = vcmp.le.f32.partialorder %v261, 0.7853982
        %vm263 = vcmp.lt.s32.totalorder %v260, 0
        %v264 = vand.u32 %v260, 2139095040
        %v265 = vshrl.u32 %v264, 23
        %v266 = vsub.s32 %v265, 127
        %v267 = vand.u32 2147483647, %v260
        %v268 = vand.u32 %v267, 8388607
        %v269 = vor.u32 %v268, 8388608
        %v270 = vsub.s32 0, %v269
        %v271 = vadd.s32 %v266, 1
        %vm272 = vcmp.gt.s32.totalorder %v271, 0
        %v273 = vsel %vm272, %v271, 0
        %v274 = vshrl.u32 %v273, 5
        %v275 = vand.u32 %v273, 31
        %v276 = vsub.s32 32, %v275
        %v277 = vshrl.u32 683565275, %v276
        %v278 = vshll.u32 683565275, %v275
        %v279 = vshrl.u32 2475754826, %v276
        %v280 = vor.u32 %v278, %v279
        %v281 = vshll.u32 2475754826, %v275
        %v282 = vshrl.u32 2131351028, %v276
        %v283 = vor.u32 %v281, %v282
        %v284 = vshll.u32 2131351028, %v275
        %v285 = vshrl.u32 2102212464, %v276
        %v286 = vor.u32 %v284, %v285
        %v287 = vshll.u32 2102212464, %v275
        %v288 = vshrl.u32 920167782, %v276
        %v289 = vor.u32 %v287, %v288
        %v290 = vshll.u32 920167782, %v275
        %v291 = vshrl.u32 1326507024, %v276
        %v292 = vor.u32 %v290, %v291
        %vm293 = vcmp.lt.s32.totalorder %v274, 1
        %vm294 = vcmp.lt.s32.totalorder %v274, 2
        %vm295 = vcmp.lt.s32.totalorder %v274, 3
        %vm296 = vcmp.lt.s32.totalorder %v274, 4
        %v297 = vsel %vm293, %v277, %v280
        %v298 = vsel %vm296, %v286, 2102212464
        %v299 = vsel %vm295, %v283, %v298
        %v300 = vsel %vm294, %v297, %v299
        %v301 = vsel %vm293, %v280, %v283
        %v302 = vsel %vm296, %v289, 920167782
        %v303 = vsel %vm295, %v286, %v302
        %v304 = vsel %vm294, %v301, %v303
        %v305 = vsel %vm293, %v283, %v286
        %v306 = vsel %vm296, %v292, 1326507024
        %v307 = vsel %vm295, %v289, %v306
        %v308 = vsel %vm294, %v305, %v307
        %v309 = vshll.u32 %v269, 8
        %v310 = vand.u32 %v309, 65535
        %v311 = vshrl.u32 %v309, 16
        %v312 = vand.u32 %v308, 65535
        %v313 = vshrl.u32 %v308, 16
        %v314 = vmul.u32 %v310, %v312
        %v315 = vmul.u32 %v310, %v313
        %v316 = vmul.u32 %v311, %v312
        %v317 = vmul.u32 %v311, %v313
        %v318 = vshll.u32 %v315, 16
        %v319 = vshrl.u32 %v315, 16
        %v320 = vshll.u32 %v316, 16
        %v321 = vshrl.u32 %v316, 16
        %vm322 = vc.u32 %v314, %v318
        %v323 = vsel %vm322, 1, 0
        %v324 = vadd.s32 %v314, %v318
        %v325 = vadd.s32 %v317, %v323
        %vm326 = vc.u32 %v324, %v320
        %v327 = vsel %vm326, 1, 0
        %v328 = vadd.s32 %v324, %v320
        %v329 = vadd.s32 %v325, %v327
        %v330 = vadd.s32 %v329, %v319
        %v331 = vadd.s32 %v330, %v321
        %v332 = vand.u32 %v309, 65535
        %v333 = vshrl.u32 %v309, 16
        %v334 = vand.u32 %v304, 65535
        %v335 = vshrl.u32 %v304, 16
        %v336 = vmul.u32 %v332, %v334
        %v337 = vmul.u32 %v332, %v335
        %v338 = vmul.u32 %v333, %v334
        %v339 = vmul.u32 %v333, %v335
        %v340 = vshll.u32 %v337, 16
        %v341 = vshrl.u32 %v337, 16
        %v342 = vshll.u32 %v338, 16
        %v343 = vshrl.u32 %v338, 16
        %vm344 = vc.u32 %v336, %v340
        %v345 = vsel %vm344, 1, 0
        %v346 = vadd.s32 %v336, %v340
        %v347 = vadd.s32 %v339, %v345
        %vm348 = vc.u32 %v346, %v342
        %v349 = vsel %vm348, 1, 0
        %v350 = vadd.s32 %v346, %v342
        %v351 = vadd.s32 %v347, %v349
        %v352 = vadd.s32 %v351, %v341
        %v353 = vadd.s32 %v352, %v343
        %v354 = vmul.u32 %v309, %v300
        %v355 = vadd.s32 %v331, %v350
        %vm356 = vc.u32 %v331, %v350
        %v357 = vadd.s32 %v353, 1
        %v358 = vsel %vm356, %v357, %v353
        %v359 = vadd.s32 %v354, %v358
        %v360 = vadd.s32 %v359, 536870912
        %v361 = vshrl.u32 %v360, 30
        %v362 = vshll.u32 %v361, 30
        %v363 = vsub.s32 %v359, %v362
        %vm364 = vcmp.lt.s32.totalorder %v363, 0
        %v365 = vsub.s32 0, %v363
        %v366 = vsel %vm364, %v365, %v363
        %v367 = vclz %v366
        %v368 = vsub.s32 %v367, 2
        %vm369 = vcmp.gt.s32.totalorder 0, %v368
        %v370 = vsel %vm369, 0, %v368
        %v371 = vsub.s32 32, %v370
        %v372 = vshll.u32 %v363, %v370
        %v373 = vshrl.u32 %v355, %v371
        %v374 = vor.u32 %v372, %v373
        %v375 = vsub.s32 4294967266, %v370
        %v376 = vadd.s32 %v375, 127
        %v377 = vshll.u32 %v376, 23
        %v378 = vor.u32 4788187, %v377
        %v379 = vand.u32 2147483647, %v378
        %v381 = vcvt.s32.f32 %v374
        %v382 = vmul.f32 %v381, %v379
        %v383 = vxor.u32 %v382, 2147483648
        %v384 = vsel %vm263, %v383, %v382
        %v385 = vsub.s32 4, %v361
        %v386 = vsel %vm263, %v385, %v361
        %v387 = vsel %vm262, %v260, %v384
        %v388 = vsel %vm262, 0, %v386
        %v389 = vmul.f32 %v387, %v387
        %v390 = vmul.f32 %v389, -0.001358992
        %v391 = vadd.f32 %v390, 0.041655596
        %v392 = vmul.f32 %v389, %v391
        %v393 = vadd.f32 %v392, -0.4999988
        %v394 = vmul.f32 %v389, %v393
        %v395 = vadd.f32 1.0, %v394
        %v396 = vmul.f32 %v387, %v387
        %v397 = vmul.f32 %v396, -0.00019511016
        %v398 = vadd.f32 %v397, 0.008332121
        %v399 = vmul.f32 %v396, %v398
        %v400 = vadd.f32 %v399, -0.16666654
        %v401 = vmul.f32 %v396, %v400
        %v402 = vadd.f32 %v401, 1.0
        %v403 = vmul.f32 %v402, %v387
        %vm404 = vweird.f32 %v260
        %v405 = vadd.s32 %v388, 3
        %v406 = vand.u32 %v405, 3
        %vm407 = vcmp.lt.s32.totalorder %v406, 2
        %vm408 = vcmp.eq.s32.totalorder %v406, 0
        %v409 = vxor.u32 %v403, 2147483648
        %v410 = vsel %vm408, %v395, %v409
        %vm411 = vcmp.eq.s32.totalorder %v406, 2
        %v412 = vxor.u32 %v395, 2147483648
        %v413 = vsel %vm411, %v412, %v403
        %v414 = vsel %vm407, %v410, %v413
        %v415 = vsel %vm404, nan, %v414
        %416 = vst [vmem:[%s152] sm:$0xff] %v415
        %417 = vadd.xlane.f32.xlu0 %v230
        %v418 = vpop.xlane.xlu0 %417
        %v419 = vadd.f32 %v228, %v418
        %v420 = vfloor.f32 %v419
        %v421 = vsub.f32 %v419, %v420
        %v422 = vld [vmem:[%s133 + $0x8] sm:$0xff]
        %v423 = vmul.f32 %v422, 6.25e-05
        %424 = vmatpush.msra.mxu0 %v227
        %425 = vmatpush.msra.mxu0 %v226
        %426 = vmatpush.msra.mxu0 %v225
        %427 = vmatpush.msra.mxu0 %v224
        %428 = vmatpush.msra.mxu0 %v223
        %429 = vmatpush.msra.mxu0 %v222
        %430 = vmatpush.msra.mxu0 %v221
        %431 = vmatpush.msra.mxu0 %v220
        %432 = vmatpush.msra.mxu0 %v219
        %433 = vmatpush.msra.mxu0 %v218
        %434 = vmatpush.msra.mxu0 %v217
        %435 = vmatpush.msra.mxu0 %v216
        %436 = vmatpush.msra.mxu0 %v215
        %437 = vmatpush.msra.mxu0 %v214
        %438 = vmatpush.msra.mxu0 %v213
        %439 = vmatpush.msra.mxu0 %v212
        %440 = vmatmul.f32.gmra.mxu0 %v423
        %v441 = vpop.f32.mrf.mxu0
        %v442 = vadd.f32 0.0, %v441
        %443 = vdwg.mxu0
        %v444 = vsub.f32 %v442, %v423
        %446 = vset.pattern.permute.xlu0 0
        %447 = vperm.xlu0 %446, %v421
        %v448 = vpop.permute.xlu0 %447
        %v450 = vadd.f32 %v444, %v448
        %v451 = vfloor.f32 %v450
        %v452 = vsub.f32 %v450, %v451
        %v453 = vmul.f32 %v452, 6.2831855
        %v454 = vand.u32 2147483647, %v453
        %vm455 = vcmp.le.f32.partialorder %v454, 0.7853982
        %vm456 = vcmp.lt.s32.totalorder %v453, 0
        %v457 = vand.u32 %v453, 2139095040
        %v458 = vshrl.u32 %v457, 23
        %v459 = vsub.s32 %v458, 127
        %v460 = vand.u32 2147483647, %v453
        %v461 = vand.u32 %v460, 8388607
        %v462 = vor.u32 %v461, 8388608
        %v463 = vsub.s32 0, %v462
        %v464 = vadd.s32 %v459, 1
        %vm465 = vcmp.gt.s32.totalorder %v464, 0
        %v466 = vsel %vm465, %v464, 0
        %v467 = vshrl.u32 %v466, 5
        %v468 = vand.u32 %v466, 31
        %v469 = vsub.s32 32, %v468
        %v470 = vshrl.u32 683565275, %v469
        %v471 = vshll.u32 683565275, %v468
        %v472 = vshrl.u32 2475754826, %v469
        %v473 = vor.u32 %v471, %v472
        %v474 = vshll.u32 2475754826, %v468
        %v475 = vshrl.u32 2131351028, %v469
        %v476 = vor.u32 %v474, %v475
        %v477 = vshll.u32 2131351028, %v468
        %v478 = vshrl.u32 2102212464, %v469
        %v479 = vor.u32 %v477, %v478
        %v480 = vshll.u32 2102212464, %v468
        %v481 = vshrl.u32 920167782, %v469
        %v482 = vor.u32 %v480, %v481
        %v483 = vshll.u32 920167782, %v468
        %v484 = vshrl.u32 1326507024, %v469
        %v485 = vor.u32 %v483, %v484
        %vm486 = vcmp.lt.s32.totalorder %v467, 1
        %vm487 = vcmp.lt.s32.totalorder %v467, 2
        %vm488 = vcmp.lt.s32.totalorder %v467, 3
        %vm489 = vcmp.lt.s32.totalorder %v467, 4
        %v490 = vsel %vm486, %v470, %v473
        %v491 = vsel %vm489, %v479, 2102212464
        %v492 = vsel %vm488, %v476, %v491
        %v493 = vsel %vm487, %v490, %v492
        %v494 = vsel %vm486, %v473, %v476
        %v495 = vsel %vm489, %v482, 920167782
        %v496 = vsel %vm488, %v479, %v495
        %v497 = vsel %vm487, %v494, %v496
        %v498 = vsel %vm486, %v476, %v479
        %v499 = vsel %vm489, %v485, 1326507024
        %v500 = vsel %vm488, %v482, %v499
        %v501 = vsel %vm487, %v498, %v500
        %v502 = vshll.u32 %v462, 8
        %v503 = vand.u32 %v502, 65535
        %v504 = vshrl.u32 %v502, 16
        %v505 = vand.u32 %v501, 65535
        %v506 = vshrl.u32 %v501, 16
        %v507 = vmul.u32 %v503, %v505
        %v508 = vmul.u32 %v503, %v506
        %v509 = vmul.u32 %v504, %v505
        %v510 = vmul.u32 %v504, %v506
        %v511 = vshll.u32 %v508, 16
        %v512 = vshrl.u32 %v508, 16
        %v513 = vshll.u32 %v509, 16
        %v514 = vshrl.u32 %v509, 16
        %vm515 = vc.u32 %v507, %v511
        %v516 = vsel %vm515, 1, 0
        %v517 = vadd.s32 %v507, %v511
        %v518 = vadd.s32 %v510, %v516
        %vm519 = vc.u32 %v517, %v513
        %v520 = vsel %vm519, 1, 0
        %v521 = vadd.s32 %v517, %v513
        %v522 = vadd.s32 %v518, %v520
        %v523 = vadd.s32 %v522, %v512
        %v524 = vadd.s32 %v523, %v514
        %v525 = vand.u32 %v502, 65535
        %v526 = vshrl.u32 %v502, 16
        %v527 = vand.u32 %v497, 65535
        %v528 = vshrl.u32 %v497, 16
        %v529 = vmul.u32 %v525, %v527
        %v530 = vmul.u32 %v525, %v528
        %v531 = vmul.u32 %v526, %v527
        %v532 = vmul.u32 %v526, %v528
        %v533 = vshll.u32 %v530, 16
        %v534 = vshrl.u32 %v530, 16
        %v535 = vshll.u32 %v531, 16
        %v536 = vshrl.u32 %v531, 16
        %vm537 = vc.u32 %v529, %v533
        %v538 = vsel %vm537, 1, 0
        %v539 = vadd.s32 %v529, %v533
        %v540 = vadd.s32 %v532, %v538
        %vm541 = vc.u32 %v539, %v535
        %v542 = vsel %vm541, 1, 0
        %v543 = vadd.s32 %v539, %v535
        %v544 = vadd.s32 %v540, %v542
        %v545 = vadd.s32 %v544, %v534
        %v546 = vadd.s32 %v545, %v536
        %v547 = vmul.u32 %v502, %v493
        %v548 = vadd.s32 %v524, %v543
        %vm549 = vc.u32 %v524, %v543
        %v550 = vadd.s32 %v546, 1
        %v551 = vsel %vm549, %v550, %v546
        %v552 = vadd.s32 %v547, %v551
        %v553 = vadd.s32 %v552, 536870912
        %v554 = vshrl.u32 %v553, 30
        %v555 = vshll.u32 %v554, 30
        %v556 = vsub.s32 %v552, %v555
        %vm557 = vcmp.lt.s32.totalorder %v556, 0
        %v558 = vsub.s32 0, %v556
        %v559 = vsel %vm557, %v558, %v556
        %v560 = vclz %v559
        %v561 = vsub.s32 %v560, 2
        %vm562 = vcmp.gt.s32.totalorder 0, %v561
        %v563 = vsel %vm562, 0, %v561
        %v564 = vsub.s32 32, %v563
        %v565 = vshll.u32 %v556, %v563
        %v566 = vshrl.u32 %v548, %v564
        %v567 = vor.u32 %v565, %v566
        %v568 = vsub.s32 4294967266, %v563
        %v569 = vadd.s32 %v568, 127
        %v570 = vshll.u32 %v569, 23
        %v571 = vor.u32 4788187, %v570
        %v572 = vand.u32 2147483647, %v571
        %v574 = vcvt.s32.f32 %v567
        %v575 = vmul.f32 %v574, %v572
        %v576 = vxor.u32 %v575, 2147483648
        %v577 = vsel %vm456, %v576, %v575
        %v578 = vsub.s32 4, %v554
        %v579 = vsel %vm456, %v578, %v554
        %v580 = vsel %vm455, %v453, %v577
        %v581 = vsel %vm455, 0, %v579
        %v582 = vmul.f32 %v580, %v580
        %v583 = vmul.f32 %v582, -0.001358992
        %v584 = vadd.f32 %v583, 0.041655596
        %v585 = vmul.f32 %v582, %v584
        %v586 = vadd.f32 %v585, -0.4999988
        %v587 = vmul.f32 %v582, %v586
        %v588 = vadd.f32 1.0, %v587
        %v589 = vmul.f32 %v580, %v580
        %v590 = vmul.f32 %v589, -0.00019511016
        %v591 = vadd.f32 %v590, 0.008332121
        %v592 = vmul.f32 %v589, %v591
        %v593 = vadd.f32 %v592, -0.16666654
        %v594 = vmul.f32 %v589, %v593
        %v595 = vadd.f32 %v594, 1.0
        %v596 = vmul.f32 %v595, %v580
        %vm597 = vweird.f32 %v453
        %v598 = vadd.s32 %v581, 3
        %v599 = vand.u32 %v598, 3
        %vm600 = vcmp.lt.s32.totalorder %v599, 2
        %vm601 = vcmp.eq.s32.totalorder %v599, 0
        %v602 = vxor.u32 %v596, 2147483648
        %v603 = vsel %vm601, %v588, %v602
        %vm604 = vcmp.eq.s32.totalorder %v599, 2
        %v605 = vxor.u32 %v588, 2147483648
        %v606 = vsel %vm604, %v605, %v596
        %v607 = vsel %vm600, %v603, %v606
        %v608 = vsel %vm597, nan, %v607
        %609 = vst [vmem:[%s152 + $0x8] sm:$0xff] %v608
        %610 = vadd.xlane.f32.xlu0 %v423
        %v611 = vpop.xlane.xlu0 %610
        %v612 = vadd.f32 %v421, %v611
        %v613 = vfloor.f32 %v612
        %v614 = vsub.f32 %v612, %v613
        %v615 = vld [vmem:[%s133 + $0x10] sm:$0xff]
        %v616 = vmul.f32 %v615, 6.25e-05
        %617 = vmatpush.msra.mxu0 %v227
        %618 = vmatpush.msra.mxu0 %v226
        %619 = vmatpush.msra.mxu0 %v225
        %620 = vmatpush.msra.mxu0 %v224
        %621 = vmatpush.msra.mxu0 %v223
        %622 = vmatpush.msra.mxu0 %v222
        %623 = vmatpush.msra.mxu0 %v221
        %624 = vmatpush.msra.mxu0 %v220
        %625 = vmatpush.msra.mxu0 %v219
        %626 = vmatpush.msra.mxu0 %v218
        %627 = vmatpush.msra.mxu0 %v217
        %628 = vmatpush.msra.mxu0 %v216
        %629 = vmatpush.msra.mxu0 %v215
        %630 = vmatpush.msra.mxu0 %v214
        %631 = vmatpush.msra.mxu0 %v213
        %632 = vmatpush.msra.mxu0 %v212
        %633 = vmatmul.f32.gmra.mxu0 %v616
        %v634 = vpop.f32.mrf.mxu0
        %v635 = vadd.f32 0.0, %v634
        %636 = vdwg.mxu0
        %v637 = vsub.f32 %v635, %v616
        %639 = vset.pattern.permute.xlu0 0
        %640 = vperm.xlu0 %639, %v614
        %v641 = vpop.permute.xlu0 %640
        %v643 = vadd.f32 %v637, %v641
        %v644 = vfloor.f32 %v643
        %v645 = vsub.f32 %v643, %v644
        %v646 = vmul.f32 %v645, 6.2831855
        %v647 = vand.u32 2147483647, %v646
        %vm648 = vcmp.le.f32.partialorder %v647, 0.7853982
        %vm649 = vcmp.lt.s32.totalorder %v646, 0
        %v650 = vand.u32 %v646, 2139095040
        %v651 = vshrl.u32 %v650, 23
        %v652 = vsub.s32 %v651, 127
        %v653 = vand.u32 2147483647, %v646
        %v654 = vand.u32 %v653, 8388607
        %v655 = vor.u32 %v654, 8388608
        %v656 = vsub.s32 0, %v655
        %v657 = vadd.s32 %v652, 1
        %vm658 = vcmp.gt.s32.totalorder %v657, 0
        %v659 = vsel %vm658, %v657, 0
        %v660 = vshrl.u32 %v659, 5
        %v661 = vand.u32 %v659, 31
        %v662 = vsub.s32 32, %v661
        %v663 = vshrl.u32 683565275, %v662
        %v664 = vshll.u32 683565275, %v661
        %v665 = vshrl.u32 2475754826, %v662
        %v666 = vor.u32 %v664, %v665
        %v667 = vshll.u32 2475754826, %v661
        %v668 = vshrl.u32 2131351028, %v662
        %v669 = vor.u32 %v667, %v668
        %v670 = vshll.u32 2131351028, %v661
        %v671 = vshrl.u32 2102212464, %v662
        %v672 = vor.u32 %v670, %v671
        %v673 = vshll.u32 2102212464, %v661
        %v674 = vshrl.u32 920167782, %v662
        %v675 = vor.u32 %v673, %v674
        %v676 = vshll.u32 920167782, %v661
        %v677 = vshrl.u32 1326507024, %v662
        %v678 = vor.u32 %v676, %v677
        %vm679 = vcmp.lt.s32.totalorder %v660, 1
        %vm680 = vcmp.lt.s32.totalorder %v660, 2
        %vm681 = vcmp.lt.s32.totalorder %v660, 3
        %vm682 = vcmp.lt.s32.totalorder %v660, 4
        %v683 = vsel %vm679, %v663, %v666
        %v684 = vsel %vm682, %v672, 2102212464
        %v685 = vsel %vm681, %v669, %v684
        %v686 = vsel %vm680, %v683, %v685
        %v687 = vsel %vm679, %v666, %v669
        %v688 = vsel %vm682, %v675, 920167782
        %v689 = vsel %vm681, %v672, %v688
        %v690 = vsel %vm680, %v687, %v689
        %v691 = vsel %vm679, %v669, %v672
        %v692 = vsel %vm682, %v678, 1326507024
        %v693 = vsel %vm681, %v675, %v692
        %v694 = vsel %vm680, %v691, %v693
        %v695 = vshll.u32 %v655, 8
        %v696 = vand.u32 %v695, 65535
        %v697 = vshrl.u32 %v695, 16
        %v698 = vand.u32 %v694, 65535
        %v699 = vshrl.u32 %v694, 16
        %v700 = vmul.u32 %v696, %v698
        %v701 = vmul.u32 %v696, %v699
        %v702 = vmul.u32 %v697, %v698
        %v703 = vmul.u32 %v697, %v699
        %v704 = vshll.u32 %v701, 16
        %v705 = vshrl.u32 %v701, 16
        %v706 = vshll.u32 %v702, 16
        %v707 = vshrl.u32 %v702, 16
        %vm708 = vc.u32 %v700, %v704
        %v709 = vsel %vm708, 1, 0
        %v710 = vadd.s32 %v700, %v704
        %v711 = vadd.s32 %v703, %v709
        %vm712 = vc.u32 %v710, %v706
        %v713 = vsel %vm712, 1, 0
        %v714 = vadd.s32 %v710, %v706
        %v715 = vadd.s32 %v711, %v713
        %v716 = vadd.s32 %v715, %v705
        %v717 = vadd.s32 %v716, %v707
        %v718 = vand.u32 %v695, 65535
        %v719 = vshrl.u32 %v695, 16
        %v720 = vand.u32 %v690, 65535
        %v721 = vshrl.u32 %v690, 16
        %v722 = vmul.u32 %v718, %v720
        %v723 = vmul.u32 %v718, %v721
        %v724 = vmul.u32 %v719, %v720
        %v725 = vmul.u32 %v719, %v721
        %v726 = vshll.u32 %v723, 16
        %v727 = vshrl.u32 %v723, 16
        %v728 = vshll.u32 %v724, 16
        %v729 = vshrl.u32 %v724, 16
        %vm730 = vc.u32 %v722, %v726
        %v731 = vsel %vm730, 1, 0
        %v732 = vadd.s32 %v722, %v726
        %v733 = vadd.s32 %v725, %v731
        %vm734 = vc.u32 %v732, %v728
        %v735 = vsel %vm734, 1, 0
        %v736 = vadd.s32 %v732, %v728
        %v737 = vadd.s32 %v733, %v735
        %v738 = vadd.s32 %v737, %v727
        %v739 = vadd.s32 %v738, %v729
        %v740 = vmul.u32 %v695, %v686
        %v741 = vadd.s32 %v717, %v736
        %vm742 = vc.u32 %v717, %v736
        %v743 = vadd.s32 %v739, 1
        %v744 = vsel %vm742, %v743, %v739
        %v745 = vadd.s32 %v740, %v744
        %v746 = vadd.s32 %v745, 536870912
        %v747 = vshrl.u32 %v746, 30
        %v748 = vshll.u32 %v747, 30
        %v749 = vsub.s32 %v745, %v748
        %vm750 = vcmp.lt.s32.totalorder %v749, 0
        %v751 = vsub.s32 0, %v749
        %v752 = vsel %vm750, %v751, %v749
        %v753 = vclz %v752
        %v754 = vsub.s32 %v753, 2
        %vm755 = vcmp.gt.s32.totalorder 0, %v754
        %v756 = vsel %vm755, 0, %v754
        %v757 = vsub.s32 32, %v756
        %v758 = vshll.u32 %v749, %v756
        %v759 = vshrl.u32 %v741, %v757
        %v760 = vor.u32 %v758, %v759
        %v761 = vsub.s32 4294967266, %v756
        %v762 = vadd.s32 %v761, 127
        %v763 = vshll.u32 %v762, 23
        %v764 = vor.u32 4788187, %v763
        %v765 = vand.u32 2147483647, %v764
        %v767 = vcvt.s32.f32 %v760
        %v768 = vmul.f32 %v767, %v765
        %v769 = vxor.u32 %v768, 2147483648
        %v770 = vsel %vm649, %v769, %v768
        %v771 = vsub.s32 4, %v747
        %v772 = vsel %vm649, %v771, %v747
        %v773 = vsel %vm648, %v646, %v770
        %v774 = vsel %vm648, 0, %v772
        %v775 = vmul.f32 %v773, %v773
        %v776 = vmul.f32 %v775, -0.001358992
        %v777 = vadd.f32 %v776, 0.041655596
        %v778 = vmul.f32 %v775, %v777
        %v779 = vadd.f32 %v778, -0.4999988
        %v780 = vmul.f32 %v775, %v779
        %v781 = vadd.f32 1.0, %v780
        %v782 = vmul.f32 %v773, %v773
        %v783 = vmul.f32 %v782, -0.00019511016
        %v784 = vadd.f32 %v783, 0.008332121
        %v785 = vmul.f32 %v782, %v784
        %v786 = vadd.f32 %v785, -0.16666654
        %v787 = vmul.f32 %v782, %v786
        %v788 = vadd.f32 %v787, 1.0
        %v789 = vmul.f32 %v788, %v773
        %vm790 = vweird.f32 %v646
        %v791 = vadd.s32 %v774, 3
        %v792 = vand.u32 %v791, 3
        %vm793 = vcmp.lt.s32.totalorder %v792, 2
        %vm794 = vcmp.eq.s32.totalorder %v792, 0
        %v795 = vxor.u32 %v789, 2147483648
        %v796 = vsel %vm794, %v781, %v795
        %vm797 = vcmp.eq.s32.totalorder %v792, 2
        %v798 = vxor.u32 %v781, 2147483648
        %v799 = vsel %vm797, %v798, %v789
        %v800 = vsel %vm793, %v796, %v799
        %v801 = vsel %vm790, nan, %v800
        %802 = vst [vmem:[%s152 + $0x10] sm:$0xff] %v801
        %803 = vadd.xlane.f32.xlu0 %v616
        %v804 = vpop.xlane.xlu0 %803
        %v805 = vadd.f32 %v614, %v804
        %v806 = vfloor.f32 %v805
        %v807 = vsub.f32 %v805, %v806
        %v808 = vld [vmem:[%s133 + $0x18] sm:$0xff]
        %v809 = vmul.f32 %v808, 6.25e-05
        %810 = vmatpush.msra.mxu0 %v227
        %811 = vmatpush.msra.mxu0 %v226
        %812 = vmatpush.msra.mxu0 %v225
        %813 = vmatpush.msra.mxu0 %v224
        %814 = vmatpush.msra.mxu0 %v223
        %815 = vmatpush.msra.mxu0 %v222
        %816 = vmatpush.msra.mxu0 %v221
        %817 = vmatpush.msra.mxu0 %v220
        %818 = vmatpush.msra.mxu0 %v219
        %819 = vmatpush.msra.mxu0 %v218
        %820 = vmatpush.msra.mxu0 %v217
        %821 = vmatpush.msra.mxu0 %v216
        %822 = vmatpush.msra.mxu0 %v215
        %823 = vmatpush.msra.mxu0 %v214
        %824 = vmatpush.msra.mxu0 %v213
        %825 = vmatpush.msra.mxu0 %v212
        %826 = vmatmul.f32.gmra.mxu0 %v809
        %v827 = vpop.f32.mrf.mxu0
        %v828 = vadd.f32 0.0, %v827
        %829 = vdwg.mxu0
        %v830 = vsub.f32 %v828, %v809
        %832 = vset.pattern.permute.xlu0 0
        %833 = vperm.xlu0 %832, %v807
        %v834 = vpop.permute.xlu0 %833
        %v836 = vadd.f32 %v830, %v834
        %v837 = vfloor.f32 %v836
        %v838 = vsub.f32 %v836, %v837
        %v839 = vmul.f32 %v838, 6.2831855
        %v840 = vand.u32 2147483647, %v839
        %vm841 = vcmp.le.f32.partialorder %v840, 0.7853982
        %vm842 = vcmp.lt.s32.totalorder %v839, 0
        %v843 = vand.u32 %v839, 2139095040
        %v844 = vshrl.u32 %v843, 23
        %v845 = vsub.s32 %v844, 127
        %v846 = vand.u32 2147483647, %v839
        %v847 = vand.u32 %v846, 8388607
        %v848 = vor.u32 %v847, 8388608
        %v849 = vsub.s32 0, %v848
        %v850 = vadd.s32 %v845, 1
        %vm851 = vcmp.gt.s32.totalorder %v850, 0
        %v852 = vsel %vm851, %v850, 0
        %v853 = vshrl.u32 %v852, 5
        %v854 = vand.u32 %v852, 31
        %v855 = vsub.s32 32, %v854
        %v856 = vshrl.u32 683565275, %v855
        %v857 = vshll.u32 683565275, %v854
        %v858 = vshrl.u32 2475754826, %v855
        %v859 = vor.u32 %v857, %v858
        %v860 = vshll.u32 2475754826, %v854
        %v861 = vshrl.u32 2131351028, %v855
        %v862 = vor.u32 %v860, %v861
        %v863 = vshll.u32 2131351028, %v854
        %v864 = vshrl.u32 2102212464, %v855
        %v865 = vor.u32 %v863, %v864
        %v866 = vshll.u32 2102212464, %v854
        %v867 = vshrl.u32 920167782, %v855
        %v868 = vor.u32 %v866, %v867
        %v869 = vshll.u32 920167782, %v854
        %v870 = vshrl.u32 1326507024, %v855
        %v871 = vor.u32 %v869, %v870
        %vm872 = vcmp.lt.s32.totalorder %v853, 1
        %vm873 = vcmp.lt.s32.totalorder %v853, 2
        %vm874 = vcmp.lt.s32.totalorder %v853, 3
        %vm875 = vcmp.lt.s32.totalorder %v853, 4
        %v876 = vsel %vm872, %v856, %v859
        %v877 = vsel %vm875, %v865, 2102212464
        %v878 = vsel %vm874, %v862, %v877
        %v879 = vsel %vm873, %v876, %v878
        %v880 = vsel %vm872, %v859, %v862
        %v881 = vsel %vm875, %v868, 920167782
        %v882 = vsel %vm874, %v865, %v881
        %v883 = vsel %vm873, %v880, %v882
        %v884 = vsel %vm872, %v862, %v865
        %v885 = vsel %vm875, %v871, 1326507024
        %v886 = vsel %vm874, %v868, %v885
        %v887 = vsel %vm873, %v884, %v886
        %v888 = vshll.u32 %v848, 8
        %v889 = vand.u32 %v888, 65535
        %v890 = vshrl.u32 %v888, 16
        %v891 = vand.u32 %v887, 65535
        %v892 = vshrl.u32 %v887, 16
        %v893 = vmul.u32 %v889, %v891
        %v894 = vmul.u32 %v889, %v892
        %v895 = vmul.u32 %v890, %v891
        %v896 = vmul.u32 %v890, %v892
        %v897 = vshll.u32 %v894, 16
        %v898 = vshrl.u32 %v894, 16
        %v899 = vshll.u32 %v895, 16
        %v900 = vshrl.u32 %v895, 16
        %vm901 = vc.u32 %v893, %v897
        %v902 = vsel %vm901, 1, 0
        %v903 = vadd.s32 %v893, %v897
        %v904 = vadd.s32 %v896, %v902
        %vm905 = vc.u32 %v903, %v899
        %v906 = vsel %vm905, 1, 0
        %v907 = vadd.s32 %v903, %v899
        %v908 = vadd.s32 %v904, %v906
        %v909 = vadd.s32 %v908, %v898
        %v910 = vadd.s32 %v909, %v900
        %v911 = vand.u32 %v888, 65535
        %v912 = vshrl.u32 %v888, 16
        %v913 = vand.u32 %v883, 65535
        %v914 = vshrl.u32 %v883, 16
        %v915 = vmul.u32 %v911, %v913
        %v916 = vmul.u32 %v911, %v914
        %v917 = vmul.u32 %v912, %v913
        %v918 = vmul.u32 %v912, %v914
        %v919 = vshll.u32 %v916, 16
        %v920 = vshrl.u32 %v916, 16
        %v921 = vshll.u32 %v917, 16
        %v922 = vshrl.u32 %v917, 16
        %vm923 = vc.u32 %v915, %v919
        %v924 = vsel %vm923, 1, 0
        %v925 = vadd.s32 %v915, %v919
        %v926 = vadd.s32 %v918, %v924
        %vm927 = vc.u32 %v925, %v921
        %v928 = vsel %vm927, 1, 0
        %v929 = vadd.s32 %v925, %v921
        %v930 = vadd.s32 %v926, %v928
        %v931 = vadd.s32 %v930, %v920
        %v932 = vadd.s32 %v931, %v922
        %v933 = vmul.u32 %v888, %v879
        %v934 = vadd.s32 %v910, %v929
        %vm935 = vc.u32 %v910, %v929
        %v936 = vadd.s32 %v932, 1
        %v937 = vsel %vm935, %v936, %v932
        %v938 = vadd.s32 %v933, %v937
        %v939 = vadd.s32 %v938, 536870912
        %v940 = vshrl.u32 %v939, 30
        %v941 = vshll.u32 %v940, 30
        %v942 = vsub.s32 %v938, %v941
        %vm943 = vcmp.lt.s32.totalorder %v942, 0
        %v944 = vsub.s32 0, %v942
        %v945 = vsel %vm943, %v944, %v942
        %v946 = vclz %v945
        %v947 = vsub.s32 %v946, 2
        %vm948 = vcmp.gt.s32.totalorder 0, %v947
        %v949 = vsel %vm948, 0, %v947
        %v950 = vsub.s32 32, %v949
        %v951 = vshll.u32 %v942, %v949
        %v952 = vshrl.u32 %v934, %v950
        %v953 = vor.u32 %v951, %v952
        %v954 = vsub.s32 4294967266, %v949
        %v955 = vadd.s32 %v954, 127
        %v956 = vshll.u32 %v955, 23
        %v957 = vor.u32 4788187, %v956
        %v958 = vand.u32 2147483647, %v957
        %v960 = vcvt.s32.f32 %v953
        %v961 = vmul.f32 %v960, %v958
        %v962 = vxor.u32 %v961, 2147483648
        %v963 = vsel %vm842, %v962, %v961
        %v964 = vsub.s32 4, %v940
        %v965 = vsel %vm842, %v964, %v940
        %v966 = vsel %vm841, %v839, %v963
        %v967 = vsel %vm841, 0, %v965
        %v968 = vmul.f32 %v966, %v966
        %v969 = vmul.f32 %v968, -0.001358992
        %v970 = vadd.f32 %v969, 0.041655596
        %v971 = vmul.f32 %v968, %v970
        %v972 = vadd.f32 %v971, -0.4999988
        %v973 = vmul.f32 %v968, %v972
        %v974 = vadd.f32 1.0, %v973
        %v975 = vmul.f32 %v966, %v966
        %v976 = vmul.f32 %v975, -0.00019511016
        %v977 = vadd.f32 %v976, 0.008332121
        %v978 = vmul.f32 %v975, %v977
        %v979 = vadd.f32 %v978, -0.16666654
        %v980 = vmul.f32 %v975, %v979
        %v981 = vadd.f32 %v980, 1.0
        %v982 = vmul.f32 %v981, %v966
        %vm983 = vweird.f32 %v839
        %v984 = vadd.s32 %v967, 3
        %v985 = vand.u32 %v984, 3
        %vm986 = vcmp.lt.s32.totalorder %v985, 2
        %vm987 = vcmp.eq.s32.totalorder %v985, 0
        %v988 = vxor.u32 %v982, 2147483648
        %v989 = vsel %vm987, %v974, %v988
        %vm990 = vcmp.eq.s32.totalorder %v985, 2
        %v991 = vxor.u32 %v974, 2147483648
        %v992 = vsel %vm990, %v991, %v982
        %v993 = vsel %vm986, %v989, %v992
        %v994 = vsel %vm983, nan, %v993
        %995 = vst [vmem:[%s152 + $0x18] sm:$0xff] %v994
        %996 = vadd.xlane.f32.xlu0 %v809
        %v997 = vpop.xlane.xlu0 %996
        %v998 = vadd.f32 %v807, %v997
        %v999 = vfloor.f32 %v998
        %v1000 = vsub.f32 %v998, %v999
        %vm1001 = vcmask 7168
        %1002 = vst.msk [vmem:[#allocation2] sm:$0xff] %vm1001, %v1000
        %s1003 = sand.u32 %s68, 1
        %s1004 = scalar_lea.sflag [#allocation5], %s1003
        %s1005 = sand.u32 %s68, 1
        %s1006 = smul.addr %s1005, 32
        %s1007 = scalar_lea.vmem [#allocation6], %s1006
        // Predicated region
        $region33: #{tpu_custom_call.1} parent=23 // pred_check
          %p1008 = pneg %p78
        $region34: #{tpu_custom_call.1} parent=23 // pred_check_branch
          %1010 = sbr.rel (%p1008) target = $region36
        $region35: #{tpu_custom_call.1} parent=23 // pred_region
          %s1011 = smul.u32 4, %s23
          %1013 = vsyncadd %s1004, 0
          %s1014 = smul.addr %s22, 8
          %s1015 = sadd.s32 %s1011, %s1014
          %s1016 = smul.addr %s1015, 8
          %s1017 = scalar_lea.hbm %s1, %s1016
          %s1019 = sshll.u32 %s1007, 4
          %s1020 = int_to_ptr.vmem [resolvable:$true] %s1019
          %s1021 = sshll.u32 %s1017, 4
          %s1022 = int_to_ptr.hbm [resolvable:$true] %s1021
          %1024 = dma.vmem_to_hbm [thread:$0]  %s1020, 512, %s1022, %s1004
        $region36: #{tpu_custom_call.1} parent=23 // pred_fallthru
          _
      $region24: #{tpu_custom_call.1} parent=5 // pred_fallthru
        _
      %p1025 = scmp.le.s32.totalorder 2, %s13
      // Predicated region
      $region37: #{tpu_custom_call.1} parent=5 // pred_check
        %p1026 = pneg %p1025
      $region38: #{tpu_custom_call.1} parent=5 // pred_check_branch
        %1028 = sbr.rel (%p1026) target = $region40
      $region39: #{tpu_custom_call.1} parent=5 // pred_region
        %s1029 = ssub.s32 %s13, 2
        // Predicated region
        $region41: #{tpu_custom_call.1} parent=39 // pred_check
          %p1030 = pneg %p84
        $region42: #{tpu_custom_call.1} parent=39 // pred_check_branch
          %1032 = sbr.rel (%p1030) target = $region44
        $region43: #{tpu_custom_call.1} parent=39 // pred_region
          %s1033 = sand.u32 %s69, 1
          %s1034 = scalar_lea.sflag [#allocation5], %s1033
          %s1035 = sand.u32 %s69, 1
          %s1036 = smul.addr %s1035, 32
          %s1037 = scalar_lea.vmem [#allocation6], %s1036
          %1039 = dma.done %s1034, 512
        $region44: #{tpu_custom_call.1} parent=39 // pred_fallthru
          _
      $region40: #{tpu_custom_call.1} parent=5 // pred_fallthru
        _
    $region6: #{tpu_custom_call.1} parent=1 // loop_footer
      %s17 = sadd.s32 1, %s13
    $region7: #{tpu_custom_call.1} parent=1 // loop_footer_branch
      %12 = sbr.rel target = $region3
    $region8: #{tpu_custom_call.1} parent=1 // loop_exit
      _
    %1040 = vsyncpa [#allocation4], 1
    %s1041 = scalar_lea.sflag [#allocation4], 1
    %1042 = vsyncpa %s1041, 1
    %1043 = vsyncpa [#allocation5], 1
    %s1044 = scalar_lea.sflag [#allocation5], 1
    %1045 = vsyncpa %s1044, 1

</llo_original>
